<compile_context>
chip_gen: v5e
topology: v5e:2x2
jax: 0.10.0
libtpu: 0.0.40
codegen_flags: <defaults>
</compile_context>

<pallas_src>
import functools

import jax
import jax.numpy as jnp
from jax.experimental import pallas as pl
from jax.experimental.pallas import tpu as pltpu


def _round_up(a, b):
    return (a + b - 1) // b * b


def _kmeans_kernel(x_ref, c_ref, cnorm_ref, idx_ref, *dist_refs,
                   matmul_dtype, return_dist):
    # x_ref:     (TN, D)     tile of input rows
    # c_ref:     (D,  Kp)    full centroid matrix (grid-resident, constant index)
    # cnorm_ref: (1,  Kp)    per-cluster squared norms (+inf in padded columns)
    # idx_ref:   (1,  TN)    argmin cluster index, lane-dense (int32)
    # dist_refs: ((TN, Kp),) distance tile -- present only when return_dist=True
    x = x_ref[...]
    mm_dtype = jnp.float32 if matmul_dtype is None else matmul_dtype
    # MXU matmul with f32 accumulation.  NOTE: bf16 operands are perf-neutral on
    # all generations (v5e included) -- the kernel is HBM-bound and the MXU is
    # mostly idle at small D; the option exists only for parity experiments.
    xc = jnp.dot(x.astype(mm_dtype), c_ref[...].astype(mm_dtype),
                 preferred_element_type=jnp.float32)              # (TN, Kp) MXU
    cn = cnorm_ref[...].astype(jnp.float32)                       # (1, Kp)
    if return_dist:
        xf = x.astype(jnp.float32)
        xsq = jnp.sum(xf * xf, axis=1, keepdims=True)             # (TN, 1) VPU
        dist = xsq - 2.0 * xc + cn                                # PyTorch eval order
        dist_refs[0][...] = dist.astype(dist_refs[0].dtype)
        sel = dist
    else:
        # ||x||^2 is constant per row, so dropping it leaves the argmin unchanged
        # and removes the square/reduce work on the idx-only fast path.
        sel = cn - 2.0 * xc
    idx_ref[...] = jnp.argmin(sel, axis=-1).astype(jnp.int32)[None, :]


def _vmem_estimate(tn, D, Kp, dist_bytes, return_dist):
    # Double-buffered pipeline footprint.  C / Cnorm use a constant index_map so
    # only one buffer is ever filled, but both are still allocated (we avoid
    # pipeline_mode=pl.Buffered(1) to stay on the proven-compiling API surface),
    # hence the x2 on those terms too.
    x_tile = 2 * tn * D * 4
    c_buf = 2 * D * Kp * 4
    cnorm = 2 * 8 * Kp * 4
    idx_tile = 2 * 8 * tn * 4
    dist_tile = 2 * tn * Kp * dist_bytes if return_dist else 0
    return x_tile + c_buf + cnorm + idx_tile + dist_tile


def _vmem_capacity_bytes():
    # Generation-aware VMEM capacity (128 MiB on v5e/v6e, 64 MiB per TC on v7x).
    # Conservative 64 MiB fallback if the query is unavailable.
    try:
        return int(getattr(pltpu.get_tpu_info(), "vmem_capacity_bytes", 64 << 20))
    except Exception:
        return 64 << 20


def apply_kmeans(x, C, Cnorm, *, return_dist=True, dist_dtype=jnp.float32,
                 matmul_dtype=None, tile_n=None, vmem_budget_bytes=None):
    """Pallas equivalent of ApplyKmeansCUDA.forward.

    x:     (N, D) float32
    C:     (D, K) float32   (cluster_centers_.T)
    Cnorm: (1, K) float32   ((C ** 2).sum(0, keepdims=True))

    Returns (argmin_idx (N,) int32, dist (N, K) dist_dtype) when return_dist,
    else just argmin_idx.  Recommended fast paths (the kernel is HBM-write
    bound): return_dist=False skips the dist writeback entirely;
    dist_dtype=jnp.bfloat16 halves it.  Defaults keep the exact f32 semantics
    of the PyTorch module; the argmin is always computed over f32 distances.
    """
    N, D = x.shape
    D2, K = C.shape
    assert D == D2, "x feature dim must match centroid dim"
    assert Cnorm.shape == (1, K), "Cnorm must be (1, K)"
    dist_bytes = jnp.dtype(dist_dtype).itemsize

    # Lane-dense cluster axis: pad K to a multiple of 128 with +inf norms so the
    # padded columns can never win the argmin.  C/Cnorm are tiny, so the pad is
    # cheap; dist is sliced back below only if padding actually happened.
    Kp = max(_round_up(K, 128), 128)
    if Kp != K:
        C = jnp.pad(C, ((0, 0), (0, Kp - K)))
        Cnorm = jnp.pad(Cnorm, ((0, 0), (0, Kp - K)),
                        constant_values=float("inf"))

    cap = _vmem_capacity_bytes()
    if vmem_budget_bytes is None:
        # ~3/4 of physical VMEM: ~48 MiB on 64 MiB parts (v7x), ~96 MiB on
        # 128 MiB parts (v5e/v6e) so large-K dist tiles don't force tiny tiles.
        vmem_budget_bytes = min((cap * 3) // 4, 100 << 20)
    if tile_n is None:
        # Big tiles amortize the ~0.35 us fixed per-grid-step overhead; the
        # high-bandwidth 64 MiB-VMEM generation (v7x) wants even larger tiles.
        tile_n = 8192 if cap <= (64 << 20) else 4096

    tn = max(_round_up(tile_n, 128), 128)
    while tn > 128 and _vmem_estimate(tn, D, Kp, dist_bytes,
                                      return_dist) > vmem_budget_bytes:
        tn = max(_round_up(tn // 2, 128), 128)
    if N <= tn:
        tn = N  # single full-extent tile (legal block shape for any N)
    grid = (pl.cdiv(N, tn),)  # ragged last tile handled by Pallas edge masking
    # TODO(synk): for huge cluster counts where D*Kp*4 alone blows the VMEM
    # budget (v7x's 64 MiB), add a K grid axis with a running (min_val, min_idx)
    # accumulator instead of shrinking tn.

    est = _vmem_estimate(tn, D, Kp, dist_bytes, return_dist)
    vmem_limit = int(min(vmem_budget_bytes, max(32 << 20, 2 * est)))

    out_shape = [jax.ShapeDtypeStruct((1, N), jnp.int32)]
    out_specs = [pl.BlockSpec((1, tn), lambda i: (0, i))]      # lane-dense idx slab
    if return_dist:
        out_shape.append(jax.ShapeDtypeStruct((N, Kp), dist_dtype))
        out_specs.append(pl.BlockSpec((tn, Kp), lambda i: (i, 0)))

    kernel = functools.partial(_kmeans_kernel, matmul_dtype=matmul_dtype,
                               return_dist=return_dist)
    outs = pl.pallas_call(
        kernel,
        out_shape=tuple(out_shape),
        grid_spec=pltpu.PrefetchScalarGridSpec(
            num_scalar_prefetch=0,
            grid=grid,
            in_specs=[
                pl.BlockSpec((tn, D), lambda i: (i, 0)),   # x tile
                pl.BlockSpec((D, Kp), lambda i: (0, 0)),   # C, revisited each step
                pl.BlockSpec((1, Kp), lambda i: (0, 0)),   # Cnorm, revisited
            ],
            out_specs=tuple(out_specs),
        ),
        compiler_params=pltpu.CompilerParams(
            dimension_semantics=("parallel",),   # N tiles shard across TCs (v7x)
            vmem_limit_bytes=vmem_limit,
        ),
    )(x, C, Cnorm)

    if return_dist:
        idx2d, dist = outs
        if Kp != K:
            dist = dist[:, :K]
        # Note: int32 idx vs torch.argmin's int64 (JAX default x64 disabled).
        return idx2d[0], dist
    (idx2d,) = outs
    return idx2d[0]


def reference(x, C, Cnorm):
    dist = jnp.sum(x * x, axis=1, keepdims=True) - 2.0 * (x @ C) + Cnorm
    return jnp.argmin(dist, axis=1), dist


if __name__ == "__main__":
    key = jax.random.PRNGKey(0)
    kx1, kx2, kx3, kc1, kc2 = jax.random.split(key, 5)

    D = 32   # feature dim

    # Deterministic synthetic "kmeans model" (the original deserializes one via
    # joblib; that host-side load has no Pallas equivalent).
    def make_model(kc, K):
        centroids = jax.random.normal(kc, (K, D), dtype=jnp.float32)
        C = centroids.T                                   # (D, K)
        Cnorm = jnp.sum(C * C, axis=0, keepdims=True)     # (1, K)
        return C, Cnorm

    C128, Cn128 = make_model(kc1, 128)    # lane-dense cluster count
    C200, Cn200 = make_model(kc2, 200)    # K not a lane multiple -> padded path

    x1 = jax.random.normal(kx1, (16, D), dtype=jnp.float32)    # single tile
    x2 = jax.random.normal(kx2, (200, D), dtype=jnp.float32)   # ragged multi-tile
    x3 = jax.random.normal(kx3, (200, D), dtype=jnp.float32)

    # Full (idx, dist) outputs.
    idx1, dist1 = apply_kmeans(x1, C128, Cn128)
    idx2, dist2 = apply_kmeans(x2, C128, Cn128, tile_n=128)
    idx3, dist3 = apply_kmeans(x3, C200, Cn200, tile_n=128)
    # Fast paths from the perf review.
    idx4 = apply_kmeans(x2, C128, Cn128, tile_n=128, return_dist=False)
    idx5, dist5 = apply_kmeans(x2, C128, Cn128, tile_n=128,
                               dist_dtype=jnp.bfloat16)

    jax.block_until_ready((idx1, dist1, idx2, dist2, idx3, dist3,
                           idx4, idx5, dist5))

    for x, C, Cn, idx, dist in ((x1, C128, Cn128, idx1, dist1),
                                (x2, C128, Cn128, idx2, dist2),
                                (x3, C200, Cn200, idx3, dist3)):
        ref_idx, ref_dist = reference(x, C, Cn)
        assert idx.shape == ref_idx.shape and dist.shape == ref_dist.shape
        assert jnp.allclose(dist, ref_dist, atol=1e-4, rtol=1e-4), "dist mismatch"
        assert jnp.array_equal(idx, ref_idx), "argmin mismatch"

    ref_idx2, ref_dist2 = reference(x2, C128, Cn128)
    assert jnp.array_equal(idx4, ref_idx2), "idx-only fast path mismatch"
    assert jnp.array_equal(idx5, ref_idx2), "bf16-dist argmin mismatch"
    assert jnp.allclose(dist5.astype(jnp.float32), ref_dist2,
                        atol=2.0, rtol=2e-2), "bf16 dist mismatch"

    print("KERNEL_OK")
</pallas_src>

<mosaic_0001>
module attributes {stable_mosaic.version = 11 : i64} {
  func.func @_kmeans_kernel(%arg0: i32, %arg1: memref<16x32xf32, #tpu.memory_space<vmem>>, %arg2: memref<32x128xf32, #tpu.memory_space<vmem>>, %arg3: memref<1x128xf32, #tpu.memory_space<vmem>>, %arg4: memref<1x16xi32, #tpu.memory_space<vmem>>, %arg5: memref<16x128xf32, #tpu.memory_space<vmem>>) attributes {dimension_semantics = [#tpu.dimension_semantics<parallel>], iteration_bounds = array<i64: 1>, scalar_prefetch = 0 : i64, scratch_operands = 0 : i64, tpu.core_type = #tpu.core_type<tc>, window_params = [{transform_indices = @transform_0, window_bounds = array<i64: 16, 32>}, {pipeline_mode = #tpu.pipeline_mode<synchronous>, transform_indices = @transform_1, window_bounds = array<i64: 32, 128>}, {pipeline_mode = #tpu.pipeline_mode<synchronous>, transform_indices = @transform_2, window_bounds = array<i64: 1, 128>}, {transform_indices = @transform_3, window_bounds = array<i64: 1, 16>}, {transform_indices = @transform_4, window_bounds = array<i64: 16, 128>}]} {
    %c0 = arith.constant 0 : index
    %c0_0 = arith.constant 0 : index
    %0 = vector.load %arg1[%c0, %c0_0] : memref<16x32xf32, #tpu.memory_space<vmem>>, vector<16x32xf32>
    %c0_1 = arith.constant 0 : index
    %c0_2 = arith.constant 0 : index
    %1 = vector.load %arg2[%c0_1, %c0_2] : memref<32x128xf32, #tpu.memory_space<vmem>>, vector<32x128xf32>
    %cst = arith.constant dense<0.000000e+00> : vector<16x128xf32>
    %2 = tpu.matmul %0, %1, %cst {dimension_numbers = #tpu.dot_dimension_numbers<[1], [0], [0], [1], [0, 0, 1, 1], [], []>} : vector<16x32xf32>, vector<32x128xf32>, vector<16x128xf32> -> vector<16x128xf32>
    %c0_3 = arith.constant 0 : index
    %c0_4 = arith.constant 0 : index
    %3 = vector.load %arg3[%c0_3, %c0_4] : memref<1x128xf32, #tpu.memory_space<vmem>>, vector<1x128xf32>
    %4 = arith.mulf %0, %0 : vector<16x32xf32>
    %cst_5 = arith.constant dense<0.000000e+00> : vector<16xf32>
    %5 = vector.multi_reduction <add>, %4, %cst_5 [1] : vector<16x32xf32> to vector<16xf32>
    %6 = vector.shape_cast %5 : vector<16xf32> to vector<16x1xf32>
    %cst_6 = arith.constant 2.000000e+00 : f32
    %7 = vector.broadcast %cst_6 : f32 to vector<16x128xf32>
    %8 = arith.mulf %7, %2 : vector<16x128xf32>
    %9 = vector.broadcast %6 : vector<16x1xf32> to vector<16x128xf32>
    %10 = arith.subf %9, %8 : vector<16x128xf32>
    %11 = vector.broadcast %3 : vector<1x128xf32> to vector<16x128xf32>
    %12 = arith.addf %10, %11 : vector<16x128xf32>
    %c0_7 = arith.constant 0 : index
    %c0_8 = arith.constant 0 : index
    %13 = vector.load %arg5[%c0_7, %c0_8] : memref<16x128xf32, #tpu.memory_space<vmem>>, vector<16x128xf32>
    tpu.vector_store %arg5[%c0_7, %c0_8], %12 {strides = array<i32>} : memref<16x128xf32, #tpu.memory_space<vmem>>, vector<16x128xf32>,
    %14 = tpu.reduce_index %12 {axis = 1 : i32, kind = #tpu.reduction_kind<arg_min>} : vector<16x128xf32> -> vector<16xi32>
    %15 = vector.shape_cast %14 : vector<16xi32> to vector<1x16xi32>
    %c0_9 = arith.constant 0 : index
    %c0_10 = arith.constant 0 : index
    %16 = vector.load %arg4[%c0_9, %c0_10] : memref<1x16xi32, #tpu.memory_space<vmem>>, vector<1x16xi32>
    tpu.vector_store %arg4[%c0_9, %c0_10], %15 {strides = array<i32>} : memref<1x16xi32, #tpu.memory_space<vmem>>, vector<1x16xi32>,
    return
  }
  func.func @transform_0(%arg0: i32) -> (i32, i32) {
    %c0_i32 = arith.constant 0 : i32
    %c0_i32_0 = arith.constant 0 : i32
    return %arg0, %c0_i32 : i32, i32
  }
  func.func @transform_1(%arg0: i32) -> (i32, i32) {
    %c0_i32 = arith.constant 0 : i32
    %c0_i32_0 = arith.constant 0 : i32
    %c0_i32_1 = arith.constant 0 : i32
    return %c0_i32, %c0_i32_0 : i32, i32
  }
  func.func @transform_2(%arg0: i32) -> (i32, i32) {
    %c0_i32 = arith.constant 0 : i32
    %c0_i32_0 = arith.constant 0 : i32
    %c0_i32_1 = arith.constant 0 : i32
    return %c0_i32, %c0_i32_0 : i32, i32
  }
  func.func @transform_3(%arg0: i32) -> (i32, i32) {
    %c0_i32 = arith.constant 0 : i32
    %c0_i32_0 = arith.constant 0 : i32
    return %c0_i32, %arg0 : i32, i32
  }
  func.func @transform_4(%arg0: i32) -> (i32, i32) {
    %c0_i32 = arith.constant 0 : i32
    %c0_i32_0 = arith.constant 0 : i32
    return %arg0, %c0_i32 : i32, i32
  }
}

</mosaic_0001>

<llo_original>
// kernel: tpu_custom_call.1
$region0: #{tpu_custom_call.1}
  #allocation0 [shape = 'u32[]', space=smem, size = 0x4, offset = 0x4, fixed_abs, tag = 'smem constant byte address 0x4 - core index']
  #allocation1 [shape = 'u32[72,128]{1,0:T(1,128)}', space=vmem, size = 0x9000, scoped, tag = 'internal scratch']
  %s0 = inlined_call_operand.hbm [shape: f32[16,32], index: 0, kind: input, shape index: {}]
  %s1 = inlined_call_operand.hbm [shape: f32[32,128], index: 1, kind: input, shape index: {}]
  %s2 = inlined_call_operand.vmem [shape: f32[1,128], index: 2, kind: input, shape index: {}]
  %s3 = inlined_call_operand.hbm [shape: s32[1,16], index: 3, kind: output, shape index: {0}]
  %s4 = inlined_call_operand.hbm [shape: f32[16,128], index: 4, kind: output, shape index: {1}]
  %5 = xla_tuple %s3, %s4
  %s6 = sld [smem:[#allocation0]]
  $region38: #{tpu_custom_call.1} parent=0
    _
  %s8 = ssub.s32 1, %s6
  %s9 = scalar_select 0, %s8, %s6
  $region1: #{tpu_custom_call.1} parent=0
    #allocation2 [shape = 'u8[8192]{0}', space=vmem, size = 0x2000, scoped, tag = 'input window, operand 0, single buffered']
    #allocation3 [shape = 's32[1]{0}', space=sflag, size = 0x4, scoped, tag = 'scoped memory for tpu_custom_call.1']
    #allocation4 [shape = 's32[1]{0}', space=sflag, size = 0x4, scoped, tag = 'scoped memory for tpu_custom_call.1']
    #allocation5 [shape = 'u8[16384]{0}', space=vmem, size = 0x4000, scoped, tag = 'input window, operand 1, single buffered']
    #allocation6 [shape = 's32[1]{0}', space=sflag, size = 0x4, scoped, tag = 'scoped memory for tpu_custom_call.1']
    #allocation7 [shape = 'u8[512]{0}', space=vmem, size = 0x400, scoped, tag = 'output window, operand 0, single buffered']
    #allocation8 [shape = 'u8[8192]{0}', space=vmem, size = 0x2000, scoped, tag = 'output window, operand 1, single buffered']
    #allocation9 [shape = 's32[1]{0}', space=sflag, size = 0x4, scoped, tag = 'scoped memory for tpu_custom_call.1']
    %10 = vsyncpa [#allocation3], 0
    %11 = vsyncpa [#allocation6], 0
    %12 = vsyncpa [#allocation4], 0
    %13 = vsyncpa [#allocation9], 0
    // Predicated region
    $region2: #{tpu_custom_call.1} parent=1 // pred_check
      _
    $region3: #{tpu_custom_call.1} parent=1 // pred_check_branch
      %15 = sbr.rel (0) target = $region5
    $region4: #{tpu_custom_call.1} parent=1 // pred_region
      %17 = vsyncadd [#allocation3], 0
      %s18 = sshll.u32 %s0, 4
      %s19 = int_to_ptr.hbm [resolvable:$true] %s18
      %s20 = sshll.u32 [#allocation2], 4
      %s21 = int_to_ptr.vmem [resolvable:$true] %s20
      %26 = dma.hbm_to_vmem [thread:$0]  %s19, 256, %s21, [#allocation3], 128, 128, 8
    $region5: #{tpu_custom_call.1} parent=1 // pred_fallthru
      _
    // Predicated region
    $region6: #{tpu_custom_call.1} parent=1 // pred_check
      _
    $region7: #{tpu_custom_call.1} parent=1 // pred_check_branch
      %28 = sbr.rel (0) target = $region9
    $region8: #{tpu_custom_call.1} parent=1 // pred_region
      %30 = vsyncadd [#allocation6], 0
      %s31 = sshll.u32 %s1, 4
      %s32 = int_to_ptr.hbm [resolvable:$true] %s31
      %s33 = sshll.u32 [#allocation5], 4
      %s34 = int_to_ptr.vmem [resolvable:$true] %s33
      %39 = dma.hbm_to_vmem [thread:$0]  %s32, 512, %s34, [#allocation6], 128, 128, 8
    $region9: #{tpu_custom_call.1} parent=1 // pred_fallthru
      _
    // Predicated region
    $region10: #{tpu_custom_call.1} parent=1 // pred_check
      _
    $region11: #{tpu_custom_call.1} parent=1 // pred_check_branch
      %41 = sbr.rel (0) target = $region13
    $region12: #{tpu_custom_call.1} parent=1 // pred_region
      _
    $region13: #{tpu_custom_call.1} parent=1 // pred_fallthru
      _
    // Predicated region
    $region14: #{tpu_custom_call.1} parent=1 // pred_check
      _
    $region15: #{tpu_custom_call.1} parent=1 // pred_check_branch
      %43 = sbr.rel (0) target = $region17
    $region16: #{tpu_custom_call.1} parent=1 // pred_region
      %45 = dma.done [#allocation3], 256
    $region17: #{tpu_custom_call.1} parent=1 // pred_fallthru
      _
    // Predicated region
    $region18: #{tpu_custom_call.1} parent=1 // pred_check
      _
    $region19: #{tpu_custom_call.1} parent=1 // pred_check_branch
      %47 = sbr.rel (0) target = $region21
    $region20: #{tpu_custom_call.1} parent=1 // pred_region
      %49 = dma.done [#allocation6], 512
    $region21: #{tpu_custom_call.1} parent=1 // pred_fallthru
      _
    %v50 = vld [vmem:[#allocation2] sm:$0xff]
    %v51 = vld [vmem:[#allocation2 + $0x8] sm:$0xff]
    %v52 = vld [vmem:[#allocation5] sm:$0xff]
    %v53 = vld [vmem:[#allocation5 + $0x8] sm:$0xff]
    %v54 = vld [vmem:[#allocation5 + $0x10] sm:$0xff]
    %v55 = vld [vmem:[#allocation5 + $0x18] sm:$0xff]
    %vm56 = vcmask 261120
    %v58 = vsel %vm56, %v50, 0
    %v61 = vsel %vm56, %v51, 0
    %63 = vmatpush.msra.mxu0 0.0
    %64 = vmatpush.msra.mxu0 0.0
    %65 = vmatpush.msra.mxu0 0.0
    %66 = vmatpush.msra.mxu0 0.0
    %67 = vmatpush.msra.mxu0 0.0
    %68 = vmatpush.msra.mxu0 0.0
    %69 = vmatpush.msra.mxu0 0.0
    %70 = vmatpush.msra.mxu0 0.0
    %71 = vmatpush.msra.mxu0 0.0
    %72 = vmatpush.msra.mxu0 0.0
    %73 = vmatpush.msra.mxu0 0.0
    %74 = vmatpush.msra.mxu0 0.0
    %75 = vmatpush.msra.mxu0 %v55
    %76 = vmatpush.msra.mxu0 %v54
    %77 = vmatpush.msra.mxu0 %v53
    %78 = vmatpush.msra.mxu0 %v52
    %79 = vmatmul.f32.gmra.mxu0 %v58
    %v80 = vpop.f32.mrf.mxu0
    %v81 = vadd.f32 0.0, %v80
    %82 = vmatmul.f32.gmra.mxu0 %v61
    %v83 = vpop.f32.mrf.mxu0
    %v84 = vadd.f32 0.0, %v83
    %85 = vdwg.mxu0
    %v86 = vld [vmem:[%s2] sm:$0x1]
    %v87 = vmul.f32 %v50, %v50
    %v88 = vmul.f32 %v51, %v51
    %v89 = vsel %vm56, %v87, 0.0
    %90 = vadd.xlane.f32.xlu0 %v89
    %v91 = vpop.xlane.xlu0 %90
    %v92 = vsel %vm56, %v88, 0.0
    %93 = vadd.xlane.f32.xlu0 %v92
    %v94 = vpop.xlane.xlu0 %93
    %v95 = vmul.f32 %v81, 2.0
    %v96 = vmul.f32 %v84, 2.0
    %v97 = vsub.f32 %v91, %v95
    %v98 = vsub.f32 %v94, %v96
    %v100 = vperm.slane %v86, 0
    %v102 = vadd.f32 %v97, %v100
    %v103 = vadd.f32 %v98, %v100
    %104 = vst [vmem:[#allocation8] sm:$0xff] %v102
    %105 = vst [vmem:[#allocation8 + $0x8] sm:$0xff] %v103
    %106 = vmin.index.xlane.f32.xlu0 %v102
    %v107 = vpop.xlane.xlu0 %106
    %108 = vmin.index.xlane.f32.xlu0 %v103
    %v109 = vpop.xlane.xlu0 %108
    %v110 = vlaneseq
    %v111 = vand.u32 %v110, 127
    %v112 = vperm.slane %v107, %v111
    %v113 = vadd.s32 %v111, 4294967288
    %v114 = vperm.slane %v109, %v113
    %vm115 = vcmask 130112
    %v116 = vsel %vm115, %v114, %v112
    %vm117 = vcmask 122880
    %118 = vst.msk [vmem:[#allocation7] sm:$0x1] %vm117, %v116
    // Predicated region
    $region22: #{tpu_custom_call.1} parent=1 // pred_check
      _
    $region23: #{tpu_custom_call.1} parent=1 // pred_check_branch
      %120 = sbr.rel (0) target = $region25
    $region24: #{tpu_custom_call.1} parent=1 // pred_region
      %122 = vsyncadd [#allocation4], 0
      %s124 = sshll.u32 [#allocation7], 4
      %s125 = int_to_ptr.vmem [resolvable:$true] %s124
      %s126 = sshll.u32 %s3, 4
      %s127 = int_to_ptr.hbm [resolvable:$true] %s126
      %129 = dma.vmem_to_hbm [thread:$0]  %s125, 16, %s127, [#allocation4]
    $region25: #{tpu_custom_call.1} parent=1 // pred_fallthru
      _
    // Predicated region
    $region26: #{tpu_custom_call.1} parent=1 // pred_check
      _
    $region27: #{tpu_custom_call.1} parent=1 // pred_check_branch
      %131 = sbr.rel (0) target = $region29
    $region28: #{tpu_custom_call.1} parent=1 // pred_region
      %133 = vsyncadd [#allocation9], 0
      %s134 = sshll.u32 [#allocation8], 4
      %s135 = int_to_ptr.vmem [resolvable:$true] %s134
      %s136 = sshll.u32 %s4, 4
      %s137 = int_to_ptr.hbm [resolvable:$true] %s136
      %142 = dma.vmem_to_hbm [thread:$0]  %s135, 256, %s137, [#allocation9], 128, 128, 8
    $region29: #{tpu_custom_call.1} parent=1 // pred_fallthru
      _
    // Predicated region
    $region30: #{tpu_custom_call.1} parent=1 // pred_check
      _
    $region31: #{tpu_custom_call.1} parent=1 // pred_check_branch
      %144 = sbr.rel (0) target = $region33
    $region32: #{tpu_custom_call.1} parent=1 // pred_region
      %146 = dma.done [#allocation4], 16
    $region33: #{tpu_custom_call.1} parent=1 // pred_fallthru
      _
    // Predicated region
    $region34: #{tpu_custom_call.1} parent=1 // pred_check
      _
    $region35: #{tpu_custom_call.1} parent=1 // pred_check_branch
      %148 = sbr.rel (0) target = $region37
    $region36: #{tpu_custom_call.1} parent=1 // pred_region
      %150 = dma.done [#allocation9], 256
    $region37: #{tpu_custom_call.1} parent=1 // pred_fallthru
      _
    %151 = vsyncpa [#allocation3], 1
    %152 = vsyncpa [#allocation6], 1
    %153 = vsyncpa [#allocation4], 1
    %154 = vsyncpa [#allocation9], 1

</llo_original>
